<compile_context>
chip_gen: v6e
topology: v6e:2x2x1
jax: 0.10.0
libtpu: 0.0.40
codegen_flags: <defaults>
</compile_context>

<pallas_src>
import jax
import jax.numpy as jnp
from jax.experimental import pallas as pl
from jax.experimental.pallas import tpu as pltpu


# ---------------------------------------------------------------------------
# Kernels
# ---------------------------------------------------------------------------
def _epe_masked_kernel(pred_ref, flow_ref, mask_ref,
                       epe_sum_ref, mask_sum_ref,
                       acc_epe, acc_mask):
    r = pl.program_id(2)

    @pl.when(r == 0)
    def _init():
        acc_epe[...] = jnp.zeros_like(acc_epe)
        acc_mask[...] = jnp.zeros_like(acc_mask)

    # Channel-unrolled L2 over the (leading) channel axis: avoids a full
    # (C, TR, L) f32 temporary; C is a small static Python int.
    num_c = pred_ref.shape[0]
    sq = None
    for c in range(num_c):
        d = pred_ref[c].astype(jnp.float32) - flow_ref[c].astype(jnp.float32)
        sq = d * d if sq is None else sq + d * d
    epe = jnp.sqrt(sq)                                      # (TR, L)
    m = mask_ref[...].astype(jnp.float32)                   # (TR, L)

    # Elementwise running accumulators (VPU only per step).
    acc_epe[...] += epe * m
    acc_mask[...] += m

    @pl.when(r == pl.num_programs(2) - 1)
    def _finalize():
        # One cross-lane (XLU) reduction per (batch, split); broadcast the
        # scalar into the (8, 128)-padded per-(n, s) output block.
        epe_sum_ref[...] = jnp.broadcast_to(
            jnp.sum(acc_epe[...], keepdims=True), (8, 128))
        mask_sum_ref[...] = jnp.broadcast_to(
            jnp.sum(acc_mask[...], keepdims=True), (8, 128))


def _epe_unmasked_kernel(pred_ref, flow_ref, epe_sum_ref, acc_epe):
    r = pl.program_id(2)

    @pl.when(r == 0)
    def _init():
        acc_epe[...] = jnp.zeros_like(acc_epe)

    num_c = pred_ref.shape[0]
    sq = None
    for c in range(num_c):
        d = pred_ref[c].astype(jnp.float32) - flow_ref[c].astype(jnp.float32)
        sq = d * d if sq is None else sq + d * d
    acc_epe[...] += jnp.sqrt(sq)

    @pl.when(r == pl.num_programs(2) - 1)
    def _finalize():
        epe_sum_ref[...] = jnp.broadcast_to(
            jnp.sum(acc_epe[...], keepdims=True), (8, 128))


# ---------------------------------------------------------------------------
# Tiling helpers
# ---------------------------------------------------------------------------
def _pack_factor(dtype):
    """Sublane packing factor: f32 -> 8, bf16/f16 -> 16, int8/bool -> 32."""
    return max(8, 32 // jnp.dtype(dtype).itemsize)


def _vmem_capacity_bytes():
    try:
        return int(pltpu.get_tpu_info().vmem_capacity_bytes)
    except Exception:
        return 64 * 1024 * 1024        # conservative fallback (v7x physical)


def _choose_layout(H, W, C, itemsize, sub, budget):
    """Pick a lane-dense (R, L) factorization of H*W (free row-major reshape).

    Preference order:
      1) L multiple of 128 dividing H*W with R divisible by `sub`  (best)
      2) L multiple of 128 dividing H*W, whole image fits one input tile
      3) original layout (L=W, R=H) with H divisible by `sub`
      4) L multiple of 128 dividing H*W (full-R tile)
      5) original layout, full-H tile
    """
    HW = H * W
    lane_opts = (512, 1024, 384, 256, 128)     # 512 is the measured sweet spot
    for L in lane_opts:
        if HW % L == 0 and (HW // L) % sub == 0:
            return L, HW // L
    for L in lane_opts:
        if HW % L == 0 and C * HW * itemsize <= budget:
            return L, HW // L
    if H % sub == 0:
        return W, H
    for L in lane_opts:
        if HW % L == 0:
            return L, HW // L
    # Very large frames with no sub-divisible / 128-divisible factorization
    # land here as a single full-H tile; acceptable for typical flow shapes.
    return W, H


def _pick_tr(R, L, C, itemsize, sub, budget):
    """Largest row tile (multiple of `sub`, divides R) within the per-input
    VMEM budget; prefers an even tile count so the spatial axis can be split
    across v7x's two TensorCores, as long as tiles stay >= ~1 MiB."""
    if R % sub != 0:
        return R                       # full-R block (== array dim: legal)
    bpr = C * L * itemsize             # bytes per row of one input tile
    cands = [t for t in range(sub, R + 1, sub) if R % t == 0]
    within = [t for t in cands if t * bpr <= budget] or [min(cands)]
    tr = max(within)
    if (R // tr) % 2 != 0:
        even = [t for t in within
                if (R // t) % 2 == 0 and t * bpr >= min(budget, 1 << 20)]
        if even:
            tr = max(even)
    return tr


# ---------------------------------------------------------------------------
# Wrapper
# ---------------------------------------------------------------------------
def epe_pallas(output, flow, mask=None):
    """End Point Error (matches the PyTorch EPE module's forward).

    output, flow: (N, C, H, W), any float dtype (cast to f32 in-kernel).
    mask:         (N, H, W) / (N, 1, H, W) or None.
    Returns a scalar float32.
    NOTE: an all-zero mask yields NaN/Inf, identical to the PyTorch
    reference (division by sum(mask) == 0).
    """
    N, C, H, W = output.shape
    assert flow.shape == output.shape

    itemsize = max(jnp.dtype(output.dtype).itemsize,
                   jnp.dtype(flow.dtype).itemsize)
    sub = max(_pack_factor(output.dtype), _pack_factor(flow.dtype))
    if mask is not None:
        sub = max(sub, _pack_factor(mask.dtype))

    vmem_cap = _vmem_capacity_bytes()
    # ~4 MiB per input tile: 2 inputs x 2 pipeline buffers (+ mask buffers +
    # f32 scratch accumulators) stays well under the limit on v5e/v6e
    # (128 MiB physical) and v7x (64 MiB physical).
    tile_budget = min(4 * 1024 * 1024, max(2 * 1024 * 1024, vmem_cap // 16))
    vmem_limit = min(48 * 1024 * 1024, (3 * vmem_cap) // 4)

    L, R = _choose_layout(H, W, C, itemsize, sub, tile_budget)
    tr = _pick_tr(R, L, C, itemsize, sub, tile_budget)
    num_tiles = R // tr
    if num_tiles >= 2 and num_tiles % 2 == 0:
        hsplit, tps = 2, num_tiles // 2      # spatial split (v7x megacore)
    else:
        hsplit, tps = 1, num_tiles

    out_r = output.reshape(N, C, R, L)       # free row-major reshapes
    flow_r = flow.reshape(N, C, R, L)

    grid = (N, hsplit, tps)
    flow_spec = pl.BlockSpec((None, C, tr, L),
                             lambda n, s, r: (n, 0, s * tps + r, 0))
    sum_spec = pl.BlockSpec((None, None, 8, 128),
                            lambda n, s, r: (n, s, 0, 0))
    compiler_params = pltpu.CompilerParams(
        dimension_semantics=("parallel", "parallel", "arbitrary"),
        vmem_limit_bytes=vmem_limit,
    )

    if mask is None:
        epe_sum = pl.pallas_call(
            _epe_unmasked_kernel,
            out_shape=jax.ShapeDtypeStruct((N, hsplit, 8, 128), jnp.float32),
            grid_spec=pltpu.PrefetchScalarGridSpec(
                num_scalar_prefetch=0,
                grid=grid,
                in_specs=[flow_spec, flow_spec],
                out_specs=sum_spec,
                scratch_shapes=[pltpu.VMEM((tr, L), jnp.float32)],
            ),
            compiler_params=compiler_params,
        )(out_r, flow_r)
        # mean(epe) == sum(epe) / (N*H*W)
        return jnp.sum(epe_sum[:, :, 0, 0]) / jnp.float32(N * H * W)

    mask_r = mask.reshape(N, R, L)
    mask_spec = pl.BlockSpec((None, tr, L),
                             lambda n, s, r: (n, s * tps + r, 0))
    epe_sum, mask_sum = pl.pallas_call(
        _epe_masked_kernel,
        out_shape=(
            jax.ShapeDtypeStruct((N, hsplit, 8, 128), jnp.float32),
            jax.ShapeDtypeStruct((N, hsplit, 8, 128), jnp.float32),
        ),
        grid_spec=pltpu.PrefetchScalarGridSpec(
            num_scalar_prefetch=0,
            grid=grid,
            in_specs=[flow_spec, flow_spec, mask_spec],
            out_specs=[sum_spec, sum_spec],
            scratch_shapes=[
                pltpu.VMEM((tr, L), jnp.float32),
                pltpu.VMEM((tr, L), jnp.float32),
            ],
        ),
        compiler_params=compiler_params,
    )(out_r, flow_r, mask_r)
    return jnp.sum(epe_sum[:, :, 0, 0]) / jnp.sum(mask_sum[:, :, 0, 0])


# ---------------------------------------------------------------------------
# Pure-JAX reference mirroring the PyTorch module
# ---------------------------------------------------------------------------
def _epe_ref(output, flow, mask=None):
    epe = jnp.sqrt(jnp.sum(
        (output.astype(jnp.float32) - flow.astype(jnp.float32)) ** 2, axis=1))
    if mask is not None:
        m = mask.astype(jnp.float32)
        return jnp.sum(epe * m) / jnp.sum(m)
    return jnp.mean(epe)


if __name__ == "__main__":
    key = jax.random.PRNGKey(0)
    k1, k2, k3, k4, k5, k6 = jax.random.split(key, 6)

    # --- small case (N=2, C=2 flow channels (u, v), 16x16) -----------------
    N, C, H, W = 2, 2, 16, 16
    output = jax.random.normal(k1, (N, C, H, W), dtype=jnp.float32)
    flow = jax.random.normal(k2, (N, C, H, W), dtype=jnp.float32)
    mask = (jax.random.uniform(k3, (N, H, W)) > 0.5).astype(jnp.float32)
    target = {"flow": flow}            # matches the module's target['flow']

    epe_nomask = epe_pallas(output, target["flow"], mask=None)
    ref_nomask = _epe_ref(output, target["flow"], mask=None)
    epe_mask = epe_pallas(output, target["flow"], mask=mask)
    ref_mask = _epe_ref(output, target["flow"], mask=mask)

    # --- bf16 flow/output with f32 mask (mixed dtypes, in-kernel f32 cast) --
    Hb, Wb = 32, 64
    out_bf = jax.random.normal(k4, (1, C, Hb, Wb),
                               dtype=jnp.float32).astype(jnp.bfloat16)
    flow_bf = jax.random.normal(k5, (1, C, Hb, Wb),
                                dtype=jnp.float32).astype(jnp.bfloat16)
    mask_bf = (jax.random.uniform(k6, (1, Hb, Wb)) > 0.5).astype(jnp.float32)
    epe_bf = epe_pallas(out_bf, flow_bf, mask=mask_bf)
    ref_bf = _epe_ref(out_bf, flow_bf, mask=mask_bf)

    # --- larger frame (N=1): exercises lane-dense flattening + hsplit=2 ----
    N2, H2, W2 = 1, 128, 2048
    out2 = jax.random.normal(k1, (N2, C, H2, W2), dtype=jnp.float32)
    flow2 = jax.random.normal(k2, (N2, C, H2, W2), dtype=jnp.float32)
    mask2 = (jax.random.uniform(k3, (N2, H2, W2)) > 0.5).astype(jnp.float32)
    epe2_nomask = epe_pallas(out2, flow2, mask=None)
    ref2_nomask = _epe_ref(out2, flow2, mask=None)
    epe2_mask = epe_pallas(out2, flow2, mask=mask2)
    ref2_mask = _epe_ref(out2, flow2, mask=mask2)

    jax.block_until_ready(
        (epe_nomask, epe_mask, epe_bf, epe2_nomask, epe2_mask))

    assert jnp.allclose(epe_nomask, ref_nomask, rtol=1e-5, atol=1e-5), (
        epe_nomask, ref_nomask)
    assert jnp.allclose(epe_mask, ref_mask, rtol=1e-5, atol=1e-5), (
        epe_mask, ref_mask)
    assert jnp.allclose(epe_bf, ref_bf, rtol=1e-3, atol=1e-3), (epe_bf, ref_bf)
    assert jnp.allclose(epe2_nomask, ref2_nomask, rtol=1e-4, atol=1e-4), (
        epe2_nomask, ref2_nomask)
    assert jnp.allclose(epe2_mask, ref2_mask, rtol=1e-4, atol=1e-4), (
        epe2_mask, ref2_mask)

    print("KERNEL_OK")
</pallas_src>

<mosaic_0001>
module attributes {stable_mosaic.version = 11 : i64} {
  func.func @_epe_unmasked_kernel(%arg0: i32, %arg1: i32, %arg2: i32, %arg3: memref<1x2x1x256xf32, #tpu.memory_space<vmem>>, %arg4: memref<1x2x1x256xf32, #tpu.memory_space<vmem>>, %arg5: memref<1x1x8x128xf32, #tpu.memory_space<vmem>>, %arg6: memref<1x256xf32, #tpu.memory_space<vmem>>) attributes {dimension_semantics = [#tpu.dimension_semantics<parallel>, #tpu.dimension_semantics<parallel>, #tpu.dimension_semantics<arbitrary>], iteration_bounds = array<i64: 2, 1, 1>, scalar_prefetch = 0 : i64, scratch_operands = 1 : i64, tpu.core_type = #tpu.core_type<tc>, window_params = [{transform_indices = @transform_0, window_bounds = array<i64: 1, 2, 1, 256>}, {transform_indices = @transform_1, window_bounds = array<i64: 1, 2, 1, 256>}, {transform_indices = @transform_2, window_bounds = array<i64: 1, 1, 8, 128>}]} {
    %c0_i32 = arith.constant 0 : i32
    %0 = arith.cmpi eq, %arg2, %c0_i32 : i32
    %1 = arith.extui %0 : i1 to i32
    %c0_i32_0 = arith.constant 0 : i32
    %2 = arith.cmpi ne, %1, %c0_i32_0 : i32
    scf.if %2 {
      %cst = arith.constant 0.000000e+00 : f32
      %23 = vector.broadcast %cst : f32 to vector<1x256xf32>
      %c0_21 = arith.constant 0 : index
      %c0_22 = arith.constant 0 : index
      %24 = vector.load %arg6[%c0_21, %c0_22] : memref<1x256xf32, #tpu.memory_space<vmem>>, vector<1x256xf32>
      tpu.vector_store %arg6[%c0_21, %c0_22], %23 {strides = array<i32>} : memref<1x256xf32, #tpu.memory_space<vmem>>, vector<1x256xf32>,
    } else {
    }
    %c0 = arith.constant 0 : index
    %c0_1 = arith.constant 0 : index
    %c0_2 = arith.constant 0 : index
    %c0_3 = arith.constant 0 : index
    %3 = vector.load %arg3[%c0, %c0_1, %c0_2, %c0_3] : memref<1x2x1x256xf32, #tpu.memory_space<vmem>>, vector<1x1x1x256xf32>
    %4 = vector.shape_cast %3 : vector<1x1x1x256xf32> to vector<1x256xf32>
    %c0_4 = arith.constant 0 : index
    %c0_5 = arith.constant 0 : index
    %c0_6 = arith.constant 0 : index
    %c0_7 = arith.constant 0 : index
    %5 = vector.load %arg4[%c0_4, %c0_5, %c0_6, %c0_7] : memref<1x2x1x256xf32, #tpu.memory_space<vmem>>, vector<1x1x1x256xf32>
    %6 = vector.shape_cast %5 : vector<1x1x1x256xf32> to vector<1x256xf32>
    %7 = arith.subf %4, %6 : vector<1x256xf32>
    %8 = arith.mulf %7, %7 : vector<1x256xf32>
    %c0_8 = arith.constant 0 : index
    %c1 = arith.constant 1 : index
    %c0_9 = arith.constant 0 : index
    %c0_10 = arith.constant 0 : index
    %9 = vector.load %arg3[%c0_8, %c1, %c0_9, %c0_10] : memref<1x2x1x256xf32, #tpu.memory_space<vmem>>, vector<1x1x1x256xf32>
    %10 = vector.shape_cast %9 : vector<1x1x1x256xf32> to vector<1x256xf32>
    %c0_11 = arith.constant 0 : index
    %c1_12 = arith.constant 1 : index
    %c0_13 = arith.constant 0 : index
    %c0_14 = arith.constant 0 : index
    %11 = vector.load %arg4[%c0_11, %c1_12, %c0_13, %c0_14] : memref<1x2x1x256xf32, #tpu.memory_space<vmem>>, vector<1x1x1x256xf32>
    %12 = vector.shape_cast %11 : vector<1x1x1x256xf32> to vector<1x256xf32>
    %13 = arith.subf %10, %12 : vector<1x256xf32>
    %14 = arith.mulf %13, %13 : vector<1x256xf32>
    %15 = arith.addf %8, %14 : vector<1x256xf32>
    %c0_15 = arith.constant 0 : index
    %c0_16 = arith.constant 0 : index
    %16 = vector.load %arg6[%c0_15, %c0_16] : memref<1x256xf32, #tpu.memory_space<vmem>>, vector<1x256xf32>
    %17 = math.sqrt %15 : vector<1x256xf32>
    %18 = arith.addf %16, %17 : vector<1x256xf32>
    %c0_17 = arith.constant 0 : index
    %c0_18 = arith.constant 0 : index
    %19 = vector.load %arg6[%c0_17, %c0_18] : memref<1x256xf32, #tpu.memory_space<vmem>>, vector<1x256xf32>
    tpu.vector_store %arg6[%c0_17, %c0_18], %18 {strides = array<i32>} : memref<1x256xf32, #tpu.memory_space<vmem>>, vector<1x256xf32>,
    %c0_i32_19 = arith.constant 0 : i32
    %20 = arith.cmpi eq, %arg2, %c0_i32_19 : i32
    %21 = arith.extui %20 : i1 to i32
    %c0_i32_20 = arith.constant 0 : i32
    %22 = arith.cmpi ne, %21, %c0_i32_20 : i32
    scf.if %22 {
      %c0_21 = arith.constant 0 : index
      %c0_22 = arith.constant 0 : index
      %23 = vector.load %arg6[%c0_21, %c0_22] : memref<1x256xf32, #tpu.memory_space<vmem>>, vector<1x256xf32>
      %24 = vector.shape_cast %23 : vector<1x256xf32> to vector<1x1x256xf32>
      %cst = arith.constant dense<0.000000e+00> : vector<1xf32>
      %25 = vector.multi_reduction <add>, %24, %cst [1, 2] : vector<1x1x256xf32> to vector<1xf32>
      %26 = vector.shape_cast %25 : vector<1xf32> to vector<1x1x1xf32>
      %27 = vector.extract %26[0, 0, 0] : f32 from vector<1x1x1xf32>
      %28 = vector.broadcast %27 : f32 to vector<1x1xf32>
      %29 = vector.shape_cast %28 : vector<1x1xf32> to vector<1x1xf32>
      %30 = vector.broadcast %29 : vector<1x1xf32> to vector<8x128xf32>
      %c0_23 = arith.constant 0 : index
      %c0_24 = arith.constant 0 : index
      %c0_25 = arith.constant 0 : index
      %c0_26 = arith.constant 0 : index
      %31 = vector.load %arg5[%c0_23, %c0_24, %c0_25, %c0_26] : memref<1x1x8x128xf32, #tpu.memory_space<vmem>>, vector<1x1x8x128xf32>
      %32 = vector.shape_cast %31 : vector<1x1x8x128xf32> to vector<8x128xf32>
      %33 = vector.shape_cast %30 : vector<8x128xf32> to vector<1x1x8x128xf32>
      tpu.vector_store %arg5[%c0_23, %c0_24, %c0_25, %c0_26], %33 {strides = array<i32>} : memref<1x1x8x128xf32, #tpu.memory_space<vmem>>, vector<1x1x8x128xf32>,
    } else {
    }
    return
  }
  func.func @transform_0(%arg0: i32, %arg1: i32, %arg2: i32) -> (i32, i32, i32, i32) {
    %c1_i32 = arith.constant 1 : i32
    %0 = arith.muli %arg1, %c1_i32 : i32
    %1 = arith.addi %0, %arg2 : i32
    %c0_i32 = arith.constant 0 : i32
    %c0_i32_0 = arith.constant 0 : i32
    %c0_i32_1 = arith.constant 0 : i32
    return %arg0, %c0_i32, %1, %c0_i32_0 : i32, i32, i32, i32
  }
  func.func @transform_1(%arg0: i32, %arg1: i32, %arg2: i32) -> (i32, i32, i32, i32) {
    %c1_i32 = arith.constant 1 : i32
    %0 = arith.muli %arg1, %c1_i32 : i32
    %1 = arith.addi %0, %arg2 : i32
    %c0_i32 = arith.constant 0 : i32
    %c0_i32_0 = arith.constant 0 : i32
    %c0_i32_1 = arith.constant 0 : i32
    return %arg0, %c0_i32, %1, %c0_i32_0 : i32, i32, i32, i32
  }
  func.func @transform_2(%arg0: i32, %arg1: i32, %arg2: i32) -> (i32, i32, i32, i32) {
    %c0_i32 = arith.constant 0 : i32
    %c0_i32_0 = arith.constant 0 : i32
    %c0_i32_1 = arith.constant 0 : i32
    return %arg0, %arg1, %c0_i32, %c0_i32_0 : i32, i32, i32, i32
  }
}

</mosaic_0001>

<llo_original>
// kernel: tpu_custom_call.1
$region0: #{tpu_custom_call.1}
  #allocation0 [shape = 'u32[]', space=smem, size = 0x4, offset = 0x4, fixed_abs, tag = 'smem constant byte address 0x4 - core index']
  #allocation1 [shape = 'u32[144,128]{1,0:T(1,128)}', space=vmem, size = 0x12000, scoped, tag = 'internal scratch']
  #allocation2 [shape = 'f32[1,256]{1,0:T(1,128)}', space=vmem, size = 0x400, scoped, tag = 'scratch operand']
  %s0 = inlined_call_operand.hbm [shape: f32[2,2,1,256], index: 0, kind: input, shape index: {}]
  %s1 = inlined_call_operand.hbm [shape: f32[2,2,1,256], index: 1, kind: input, shape index: {}]
  %s2 = inlined_call_operand.hbm [shape: f32[2,1,8,128], index: 2, kind: output, shape index: {}]
  %s3 = sld [smem:[#allocation0]]
  $region57: #{tpu_custom_call.1} parent=0
    _
  %s5 = ssub.s32 1, %s3
  %s6 = scalar_select 0, %s5, %s3
  $region1: #{tpu_custom_call.1} parent=0
    #allocation3 [shape = 'u8[4096]{0}', space=vmem, size = 0x1000, scoped, tag = 'input window, operand 0']
    #allocation4 [shape = 's32[2]{0}', space=sflag, size = 0x8, scoped, tag = 'scoped memory for tpu_custom_call.1']
    #allocation5 [shape = 's32[2]{0}', space=sflag, size = 0x8, scoped, tag = 'scoped memory for tpu_custom_call.1']
    #allocation6 [shape = 'u8[4096]{0}', space=vmem, size = 0x1000, scoped, tag = 'input window, operand 1']
    #allocation7 [shape = 's32[2]{0}', space=sflag, size = 0x8, scoped, tag = 'scoped memory for tpu_custom_call.1']
    #allocation8 [shape = 'u8[8192]{0}', space=vmem, size = 0x2000, scoped, tag = 'output window, operand 0']
    %7 = vsyncpa [#allocation4], 0
    %s8 = scalar_lea.sflag [#allocation4], 1
    %9 = vsyncpa %s8, 0
    %10 = vsyncpa [#allocation7], 0
    %s11 = scalar_lea.sflag [#allocation7], 1
    %12 = vsyncpa %s11, 0
    %13 = vsyncpa [#allocation5], 0
    %s14 = scalar_lea.sflag [#allocation5], 1
    %15 = vsyncpa %s14, 0
    loop: start=0, step=1, limit=4
    $region2: #{tpu_custom_call.1} parent=1 // loop_pre_header
      _
    $region3: #{tpu_custom_call.1} parent=1 // loop_header
      %s17 = sphi 0, %s21
      %p18 = scmp.ge.s32.totalorder %s17, 4
      %s24 = sphi 0, %s43
      %s25 = sphi 0, %s39
      %s26 = sphi 0, %s35
      %s27 = sphi 0, %s24
      %s28 = sphi 0, %s25
      %s29 = sphi 0, %s26
      %s30 = sphi 0, %s27
      %s31 = sphi 0, %s28
      %s32 = sphi 0, %s29
      %s50 = sphi 0, %s52
      %s53 = sphi 0, %s50
      %s54 = sphi 0, %s53
      %s70 = sphi 0, %s54
      %s80 = sphi 0, %s82
      %s83 = sphi 0, %s80
      %s84 = sphi 0, %s83
      %s100 = sphi 0, %s84
      %s108 = sphi 0, %s110
      %s111 = sphi 0, %s108
      %s112 = sphi 0, %s111
      %s128 = sphi 0, %s112
    $region4: #{tpu_custom_call.1} parent=1 // loop_header_branch
      %20 = sbr.rel (%p18) target = $region8
    $region5: #{tpu_custom_call.1} parent=1 // loop_body
      %s22 = ssub.s32 %s17, 1
      %s23 = ssub.s32 %s17, 2
      %s33 = sadd.s32 1, %s26
      %p34 = scmp.ge.s32.totalorder %s33, 1
      %s35 = scalar_select %p34, 0, %s33
      %s36 = sadd.s32 1, %s25
      %s37 = scalar_select %p34, %s36, %s25
      %p38 = scmp.ge.s32.totalorder %s37, 1
      %s39 = scalar_select %p38, 0, %s37
      %s40 = sadd.s32 1, %s24
      %s41 = scalar_select %p38, %s40, %s24
      %p42 = scmp.ge.s32.totalorder %s41, 2
      %s43 = scalar_select %p42, 0, %s41
      %s44 = sadd.s32 %s25, %s26
      %s45 = sadd.s32 %s39, %s35
      %s46 = ssub.s32 %s24, %s43
      %s47 = ssub.s32 %s44, %s45
      %s48 = sor.u32 %s46, %s47
      %p49 = scmp.eq.s32.totalorder %s48, 0
      %s51 = sadd.s32 %s50, 1
      %s52 = scalar_select %p49, %s50, %s51
      %p55 = pneg %p49
      %p56 = scmp.eq.s32.totalorder %s17, 1
      %p57 = por %p55, %p56
      %p58 = scmp.ne.s32.totalorder %s50, %s53
      %p59 = scmp.eq.s32.totalorder %s17, 0
      %p60 = por %p58, %p59
      %p61 = scmp.ne.s32.totalorder %s50, %s53
      %p62 = scmp.eq.s32.totalorder %s22, 1
      %p63 = por %p61, %p62
      %p64 = scmp.ne.s32.totalorder %s53, %s54
      %p65 = scmp.eq.s32.totalorder %s22, 0
      %p66 = por %p64, %p65
      %p67 = scmp.ne.s32.totalorder %s53, %s54
      %p68 = scmp.eq.s32.totalorder %s23, 1
      %p69 = por %p67, %p68
      %p71 = scmp.ne.s32.totalorder %s54, %s70
      %p72 = scmp.eq.s32.totalorder %s23, 0
      %p73 = por %p71, %p72
      %s74 = sadd.s32 %s25, %s26
      %s75 = sadd.s32 %s39, %s35
      %s76 = ssub.s32 %s24, %s43
      %s77 = ssub.s32 %s74, %s75
      %s78 = sor.u32 %s76, %s77
      %p79 = scmp.eq.s32.totalorder %s78, 0
      %s81 = sadd.s32 %s80, 1
      %s82 = scalar_select %p79, %s80, %s81
      %p85 = pneg %p79
      %p86 = scmp.eq.s32.totalorder %s17, 1
      %p87 = por %p85, %p86
      %p88 = scmp.ne.s32.totalorder %s80, %s83
      %p89 = scmp.eq.s32.totalorder %s17, 0
      %p90 = por %p88, %p89
      %p91 = scmp.ne.s32.totalorder %s80, %s83
      %p92 = scmp.eq.s32.totalorder %s22, 1
      %p93 = por %p91, %p92
      %p94 = scmp.ne.s32.totalorder %s83, %s84
      %p95 = scmp.eq.s32.totalorder %s22, 0
      %p96 = por %p94, %p95
      %p97 = scmp.ne.s32.totalorder %s83, %s84
      %p98 = scmp.eq.s32.totalorder %s23, 1
      %p99 = por %p97, %p98
      %p101 = scmp.ne.s32.totalorder %s84, %s100
      %p102 = scmp.eq.s32.totalorder %s23, 0
      %p103 = por %p101, %p102
      %s104 = ssub.s32 %s24, %s43
      %s105 = ssub.s32 %s25, %s39
      %s106 = sor.u32 %s104, %s105
      %p107 = scmp.eq.s32.totalorder %s106, 0
      %s109 = sadd.s32 %s108, 1
      %s110 = scalar_select %p107, %s108, %s109
      %p113 = pneg %p107
      %p114 = scmp.eq.s32.totalorder %s17, 1
      %p115 = por %p113, %p114
      %p116 = scmp.ne.s32.totalorder %s108, %s111
      %p117 = scmp.eq.s32.totalorder %s17, 0
      %p118 = por %p116, %p117
      %p119 = scmp.ne.s32.totalorder %s108, %s111
      %p120 = scmp.eq.s32.totalorder %s22, 1
      %p121 = por %p119, %p120
      %p122 = scmp.ne.s32.totalorder %s111, %s112
      %p123 = scmp.eq.s32.totalorder %s22, 0
      %p124 = por %p122, %p123
      %p125 = scmp.ne.s32.totalorder %s111, %s112
      %p126 = scmp.eq.s32.totalorder %s23, 1
      %p127 = por %p125, %p126
      %p129 = scmp.ne.s32.totalorder %s112, %s128
      %p130 = scmp.eq.s32.totalorder %s23, 0
      %p131 = por %p129, %p130
      %p132 = scmp.le.s32.totalorder 1, %s17
      %p133 = scmp.lt.s32.totalorder %s17, 3
      %p134 = pnand %p132, %p133
      %p135 = pneg %p134
      // Predicated region
      $region9: #{tpu_custom_call.1} parent=5 // pred_check
        _
      $region10: #{tpu_custom_call.1} parent=5 // pred_check_branch
        %137 = sbr.rel (%p134) target = $region12
      $region11: #{tpu_custom_call.1} parent=5 // pred_region
        %s138 = ssub.s32 %s17, 1
      $region12: #{tpu_custom_call.1} parent=5 // pred_fallthru
        _
      %p139 = scmp.lt.s32.totalorder %s17, 2
      // Predicated region
      $region13: #{tpu_custom_call.1} parent=5 // pred_check
        %p140 = pneg %p139
      $region14: #{tpu_custom_call.1} parent=5 // pred_check_branch
        %142 = sbr.rel (%p140) target = $region16
      $region15: #{tpu_custom_call.1} parent=5 // pred_region
        // Predicated region
        $region17: #{tpu_custom_call.1} parent=15 // pred_check
          %p143 = pneg %p60
        $region18: #{tpu_custom_call.1} parent=15 // pred_check_branch
          %145 = sbr.rel (%p143) target = $region20
        $region19: #{tpu_custom_call.1} parent=15 // pred_region
          %s146 = sand.u32 %s50, 1
          %s147 = scalar_lea.sflag [#allocation4], %s146
          %s148 = sand.u32 %s50, 1
          %s149 = smul.addr %s148, 4
          %s150 = scalar_lea.vmem [#allocation3], %s149
          %s151 = sadd.s32 %s25, %s26
          %s153 = ssub.s32 64, 64
          %154 = vsyncadd %s147, %s153
          %s155 = smul.addr %s151, 2
          %s156 = smul.addr %s24, 4
          %s157 = sadd.s32 %s155, %s156
          %s158 = smul.addr %s157, 16
          %s159 = scalar_lea.hbm %s0, %s158
          %s160 = sshll.u32 %s150, 4
          %s161 = int_to_ptr.vmem [resolvable:$true] %s160
          %166 = dma.hbm_to_vmem [thread:$0]  %s159, 64, %s161, %s147, 32, 32, 2
        $region20: #{tpu_custom_call.1} parent=15 // pred_fallthru
          _
        // Predicated region
        $region21: #{tpu_custom_call.1} parent=15 // pred_check
          %p167 = pneg %p90
        $region22: #{tpu_custom_call.1} parent=15 // pred_check_branch
          %169 = sbr.rel (%p167) target = $region24
        $region23: #{tpu_custom_call.1} parent=15 // pred_region
          %s170 = sand.u32 %s80, 1
          %s171 = scalar_lea.sflag [#allocation7], %s170
          %s172 = sand.u32 %s80, 1
          %s173 = smul.addr %s172, 4
          %s174 = scalar_lea.vmem [#allocation6], %s173
          %s175 = sadd.s32 %s25, %s26
          %s177 = ssub.s32 64, 64
          %178 = vsyncadd %s171, %s177
          %s179 = smul.addr %s175, 2
          %s180 = smul.addr %s24, 4
          %s181 = sadd.s32 %s179, %s180
          %s182 = smul.addr %s181, 16
          %s183 = scalar_lea.hbm %s1, %s182
          %s184 = sshll.u32 %s174, 4
          %s185 = int_to_ptr.vmem [resolvable:$true] %s184
          %190 = dma.hbm_to_vmem [thread:$0]  %s183, 64, %s185, %s171, 32, 32, 2
        $region24: #{tpu_custom_call.1} parent=15 // pred_fallthru
          _
      $region16: #{tpu_custom_call.1} parent=5 // pred_fallthru
        _
      %p191 = scmp.le.s32.totalorder 1, %s17
      %p192 = scmp.lt.s32.totalorder %s17, 3
      %p193 = pnand %p191, %p192
      %p194 = pneg %p193
      // Predicated region
      $region25: #{tpu_custom_call.1} parent=5 // pred_check
        _
      $region26: #{tpu_custom_call.1} parent=5 // pred_check_branch
        %196 = sbr.rel (%p193) target = $region28
      $region27: #{tpu_custom_call.1} parent=5 // pred_region
        %s197 = ssub.s32 %s17, 1
        %s198 = sand.u32 %s53, 1
        %s199 = scalar_lea.sflag [#allocation4], %s198
        %s200 = sand.u32 %s53, 1
        %s201 = smul.addr %s200, 4
        %s202 = scalar_lea.vmem [#allocation3], %s201
        // Predicated region
        $region29: #{tpu_custom_call.1} parent=27 // pred_check
          %p203 = pneg %p66
        $region30: #{tpu_custom_call.1} parent=27 // pred_check_branch
          %205 = sbr.rel (%p203) target = $region32
        $region31: #{tpu_custom_call.1} parent=27 // pred_region
          %206 = dma.done %s199, 64
        $region32: #{tpu_custom_call.1} parent=27 // pred_fallthru
          _
        %s207 = sand.u32 %s83, 1
        %s208 = scalar_lea.sflag [#allocation7], %s207
        %s209 = sand.u32 %s83, 1
        %s210 = smul.addr %s209, 4
        %s211 = scalar_lea.vmem [#allocation6], %s210
        // Predicated region
        $region33: #{tpu_custom_call.1} parent=27 // pred_check
          %p212 = pneg %p96
        $region34: #{tpu_custom_call.1} parent=27 // pred_check_branch
          %214 = sbr.rel (%p212) target = $region36
        $region35: #{tpu_custom_call.1} parent=27 // pred_region
          %215 = dma.done %s208, 64
        $region36: #{tpu_custom_call.1} parent=27 // pred_fallthru
          _
        %s216 = sand.u32 %s53, 1
        %s217 = scalar_lea.sflag [#allocation4], %s216
        %s218 = sand.u32 %s53, 1
        %s219 = smul.addr %s218, 4
        %s220 = scalar_lea.vmem [#allocation3], %s219
        %p221 = pneg %p66
        %p222 = pneg %p63
        %s223 = sand.u32 %s83, 1
        %s224 = scalar_lea.sflag [#allocation7], %s223
        %s225 = sand.u32 %s83, 1
        %s226 = smul.addr %s225, 4
        %s227 = scalar_lea.vmem [#allocation6], %s226
        %p228 = pneg %p96
        %p229 = pneg %p93
        %p230 = pneg %p124
        %p231 = pneg %p121
        %s232 = sand.u32 %s111, 1
        %s233 = scalar_lea.sflag [#allocation5], %s232
        %s234 = sand.u32 %s111, 1
        %s235 = smul.addr %s234, 8
        %s236 = scalar_lea.vmem [#allocation8], %s235
        %s237 = sadd.s32 %s28, %s29
        %s238 = sadd.s32 %s28, %s29
        %p239 = scmp.eq.s32.totalorder %s29, 0
        // Predicated region
        $region37: #{tpu_custom_call.1} parent=27 // pred_check
          %p240 = pneg %p239
        $region38: #{tpu_custom_call.1} parent=27 // pred_check_branch
          %242 = sbr.rel (%p240) target = $region40
        $region39: #{tpu_custom_call.1} parent=27 // pred_region
          %v243 = vlaneseq
          %vm244 = vcmp.ge.s32.totalorder %v243, 0
          %vm245 = vcmp.lt.s32.totalorder %v243, 256
          %vm246 = vmand %vm244, %vm245
          %247 = vst.msk [vmem:[#allocation2] sm:$0x3] %vm246, 0.0
        $region40: #{tpu_custom_call.1} parent=27 // pred_fallthru
          _
        %v248 = vld [vmem:[%s202] sm:$0x3]
        %v249 = vld [vmem:[%s211] sm:$0x3]
        %v250 = vsub.f32 %v248, %v249
        %v251 = vmul.f32 %v250, %v250
        %s252 = scalar_lea.vmem %s202, 2 [#allocation3]
        %v253 = vld [vmem:[%s252] sm:$0x3]
        %s254 = scalar_lea.vmem %s211, 2 [#allocation6]
        %v255 = vld [vmem:[%s254] sm:$0x3]
        %v256 = vsub.f32 %v253, %v255
        %v257 = vmul.f32 %v256, %v256
        %v258 = vadd.f32 %v251, %v257
        %v259 = vld [vmem:[#allocation2] sm:$0x3]
        %v260 = vrsqrt.pop %v258
        %v261 = vmul.f32 %v258, %v260
        %vm262 = vcmp.eq.f32.partialorder %v258, inf
        %v263 = vsel %vm262, %v258, %v261
        %vm264 = vcmp.eq.f32.partialorder %v258, 0.0
        %v265 = vand.u32 %v258, 2147483648
        %v266 = vsel %vm264, %v265, %v263
        %v267 = vadd.f32 %v259, %v266
        %v268 = vlaneseq
        %vm269 = vcmp.ge.s32.totalorder %v268, 0
        %vm270 = vcmp.lt.s32.totalorder %v268, 256
        %vm271 = vmand %vm269, %vm270
        %272 = vst.msk [vmem:[#allocation2] sm:$0x3] %vm271, %v267
        // Predicated region
        $region41: #{tpu_custom_call.1} parent=27 // pred_check
          %p273 = pneg %p239
        $region42: #{tpu_custom_call.1} parent=27 // pred_check_branch
          %275 = sbr.rel (%p273) target = $region44
        $region43: #{tpu_custom_call.1} parent=27 // pred_region
          %v276 = vld [vmem:[#allocation2] sm:$0x3]
          %v278 = vlaneseq
          %v279 = vshrl.u32 %v278, 7
          %v280 = vsub.s32 0, %v279
          %v281 = vrot.slane %v276, %v280
          %v282 = vlaneseq
          %v283 = vshrl.u32 %v282, 7
          %v284 = vsub.s32 1, %v283
          %v285 = vrot.slane %v276, %v284
          %vm288 = vcmask 1040384
          %v289 = vsel %vm288, %v281, 0.0
          %v290 = vsel %vm288, %v285, 0.0
          %v291 = vadd.f32 %v289, %v290
          %292 = vadd.xlane.f32.xlu0 %v291
          %v293 = vpop.xlane.xlu0 %292
          %v294 = vrot.slane %v293, 4
          %v295 = vadd.f32 %v293, %v294
          %v296 = vrot.slane %v295, 2
          %v297 = vadd.f32 %v295, %v296
          %v298 = vrot.slane %v297, 1
          %v299 = vadd.f32 %v297, %v298
          %s300 = vtos %v299
          %v301 = vstv %s300
          %302 = vst [vmem:[%s236] sm:$0xff] %v301
        $region44: #{tpu_custom_call.1} parent=27 // pred_fallthru
          _
        %s303 = sand.u32 %s111, 1
        %s304 = scalar_lea.sflag [#allocation5], %s303
        %s305 = sand.u32 %s111, 1
        %s306 = smul.addr %s305, 8
        %s307 = scalar_lea.vmem [#allocation8], %s306
        // Predicated region
        $region45: #{tpu_custom_call.1} parent=27 // pred_check
          %p308 = pneg %p121
        $region46: #{tpu_custom_call.1} parent=27 // pred_check_branch
          %310 = sbr.rel (%p308) target = $region48
        $region47: #{tpu_custom_call.1} parent=27 // pred_region
          %s312 = ssub.s32 128, 128
          %313 = vsyncadd %s304, %s312
          %s314 = sadd.s32 %s28, %s27
          %s315 = smul.addr %s314, 128
          %s316 = scalar_lea.hbm %s2, %s315
          %s318 = sshll.u32 %s307, 4
          %s319 = int_to_ptr.vmem [resolvable:$true] %s318
          %321 = dma.vmem_to_hbm [thread:$0]  %s319, 128, %s316, %s304
        $region48: #{tpu_custom_call.1} parent=27 // pred_fallthru
          _
      $region28: #{tpu_custom_call.1} parent=5 // pred_fallthru
        _
      %p322 = scmp.le.s32.totalorder 2, %s17
      // Predicated region
      $region49: #{tpu_custom_call.1} parent=5 // pred_check
        %p323 = pneg %p322
      $region50: #{tpu_custom_call.1} parent=5 // pred_check_branch
        %325 = sbr.rel (%p323) target = $region52
      $region51: #{tpu_custom_call.1} parent=5 // pred_region
        %s326 = ssub.s32 %s17, 2
        // Predicated region
        $region53: #{tpu_custom_call.1} parent=51 // pred_check
          %p327 = pneg %p127
        $region54: #{tpu_custom_call.1} parent=51 // pred_check_branch
          %329 = sbr.rel (%p327) target = $region56
        $region55: #{tpu_custom_call.1} parent=51 // pred_region
          %s330 = sand.u32 %s112, 1
          %s331 = scalar_lea.sflag [#allocation5], %s330
          %s332 = sand.u32 %s112, 1
          %s333 = smul.addr %s332, 8
          %s334 = scalar_lea.vmem [#allocation8], %s333
          %335 = dma.done %s331, 128
        $region56: #{tpu_custom_call.1} parent=51 // pred_fallthru
          _
      $region52: #{tpu_custom_call.1} parent=5 // pred_fallthru
        _
    $region6: #{tpu_custom_call.1} parent=1 // loop_footer
      %s21 = sadd.s32 1, %s17
    $region7: #{tpu_custom_call.1} parent=1 // loop_footer_branch
      %16 = sbr.rel target = $region3
    $region8: #{tpu_custom_call.1} parent=1 // loop_exit
      _
    %336 = vsyncpa [#allocation4], 1
    %s337 = scalar_lea.sflag [#allocation4], 1
    %338 = vsyncpa %s337, 1
    %339 = vsyncpa [#allocation7], 1
    %s340 = scalar_lea.sflag [#allocation7], 1
    %341 = vsyncpa %s340, 1
    %342 = vsyncpa [#allocation5], 1
    %s343 = scalar_lea.sflag [#allocation5], 1
    %344 = vsyncpa %s343, 1

</llo_original>
